<compile_context>
chip_gen: v5e
topology: v5e:2x2
jax: 0.10.0
libtpu: 0.0.40
codegen_flags: <defaults>
</compile_context>

<pallas_src>
import jax
import jax.numpy as jnp
from jax.experimental import pallas as pl
from jax.experimental.pallas import tpu as pltpu

BN_EPS = 1e-5            # PyTorch BatchNorm1d default eps
DROP_P = 0.2             # feature-dropout probability for augmented views
NUM_LAYERS = 2
OUT_LANE_MIN = 128       # lane-dense output slab width (multiple of 128)


# ----------------------------------------------------------------------------
# Fused Pallas kernel: 3 views x (2-layer GIN encoder + global add pool)
# ----------------------------------------------------------------------------
def _gconv3_kernel(x_ref,                                   # (N, F) bf16, per-view
                   a_ref, p_ref,                            # A+I (N,N), pool (G,N)
                   w1_0_ref, w2_0_ref, w1_1_ref, w2_1_ref,  # bf16 weights
                   bias_ref,                                # packed (4, H) f32 biases
                   g_ref):                                  # (G, OUT_PAD) per-view out
    n_nodes = x_ref.shape[0]
    hidden = w2_0_ref.shape[1]

    a_hat = a_ref[...]        # bf16, A + I (0/1 entries -> exact in bf16)
    pool = p_ref[...]         # bf16, one-hot graph pooling matrix
    inv_n = 1.0 / float(n_nodes)

    def gin_layer(z_bf16, w1_ref, w2_ref, b1, b2):
        # GINConv aggregation (eps = 0): (A + I) @ z in a single MXU pass.
        agg = jnp.dot(a_hat, z_bf16, preferred_element_type=jnp.float32)
        # make_gin_conv MLP: Linear -> ReLU -> Linear  (bf16 operands, f32 acc)
        h = jnp.dot(agg.astype(jnp.bfloat16), w1_ref[...],
                    preferred_element_type=jnp.float32) + b1
        h = jnp.maximum(h, 0.0)
        h = jnp.dot(h.astype(jnp.bfloat16), w2_ref[...],
                    preferred_element_type=jnp.float32) + b2
        # outer F.relu(z) after the conv
        h = jnp.maximum(h, 0.0)
        # BatchNorm1d (training-mode batch stats, gamma=1, beta=0), f32 math,
        # sum / sum-of-squares trick: reduce h only once.
        mu = jnp.sum(h, axis=0, keepdims=True) * inv_n
        msq = jnp.sum(h * h, axis=0, keepdims=True) * inv_n
        var = jnp.maximum(msq - mu * mu, 0.0)
        return (h - mu) * jax.lax.rsqrt(var + BN_EPS)

    b1_0 = bias_ref[0:1, :]
    b2_0 = bias_ref[1:2, :]
    b1_1 = bias_ref[2:3, :]
    b2_1 = bias_ref[3:4, :]

    z1 = gin_layer(x_ref[...], w1_0_ref, w2_0_ref, b1_0, b2_0)
    z2 = gin_layer(z1.astype(jnp.bfloat16), w1_1_ref, w2_1_ref, b1_1, b2_1)

    # global_add_pool per layer; assemble one lane-dense output slab so the
    # writeback is a single unmasked full-tile store.
    g1 = jnp.dot(pool, z1.astype(jnp.bfloat16), preferred_element_type=jnp.float32)
    g2 = jnp.dot(pool, z2.astype(jnp.bfloat16), preferred_element_type=jnp.float32)
    n_graphs = g1.shape[0]
    pad_w = g_ref.shape[1] - NUM_LAYERS * hidden
    pieces = [g1, g2]
    if pad_w > 0:
        pieces.append(jnp.zeros((n_graphs, pad_w), jnp.float32))
    g_ref[...] = jnp.concatenate(pieces, axis=1).astype(g_ref.dtype)


def _make_gconv3(N, F, H, G):
    out_pad = max(OUT_LANE_MIN, ((NUM_LAYERS * H + 127) // 128) * 128)

    grid_spec = pltpu.PrefetchScalarGridSpec(
        num_scalar_prefetch=0,
        grid=(3,),                      # view axis: clean, aug1, aug2
        in_specs=[
            pl.BlockSpec((None, N, F), lambda v: (v, 0, 0)),   # x views
            pl.BlockSpec((N, N), lambda v: (0, 0)),            # A + I (shared)
            pl.BlockSpec((G, N), lambda v: (0, 0)),            # pooling P (shared)
            pl.BlockSpec((F, H), lambda v: (0, 0)),            # w1_0
            pl.BlockSpec((H, H), lambda v: (0, 0)),            # w2_0
            pl.BlockSpec((H, H), lambda v: (0, 0)),            # w1_1
            pl.BlockSpec((H, H), lambda v: (0, 0)),            # w2_1
            pl.BlockSpec((4, H), lambda v: (0, 0)),            # packed biases
        ],
        out_specs=pl.BlockSpec((None, G, out_pad), lambda v: (v, 0, 0)),
    )

    flops = 3 * (2 * N * N * F + 2 * N * F * H + 2 * N * H * H      # layer 1
                 + 2 * N * N * H + 2 * N * H * H + 2 * N * H * H    # layer 2
                 + 2 * (2 * G * N * H))                             # pooling
    bytes_accessed = (3 * N * F * 2 + N * N * 2 + G * N * 2
                      + (F * H + 3 * H * H) * 2 + 4 * H * 4
                      + 3 * G * out_pad * 4)

    return pl.pallas_call(
        _gconv3_kernel,
        grid_spec=grid_spec,
        out_shape=jax.ShapeDtypeStruct((3, G, out_pad), jnp.float32),
        compiler_params=pltpu.CompilerParams(
            dimension_semantics=("parallel",)),   # v7x megacore over views
        cost_estimate=pl.CostEstimate(
            flops=flops, transcendentals=3 * NUM_LAYERS * H,
            bytes_accessed=bytes_accessed),
    )


# ----------------------------------------------------------------------------
# Parameter init (deterministic, xavier_uniform like Encoder.init_emb)
# ----------------------------------------------------------------------------
def xavier_uniform(key, fan_in, fan_out):
    bound = jnp.sqrt(6.0 / (fan_in + fan_out))
    return jax.random.uniform(key, (fan_in, fan_out), jnp.float32, -bound, bound)


def init_gconv_params(key, feat_dim, n_hidden):
    k = jax.random.split(key, 4)
    return {
        "w1_0": xavier_uniform(k[0], feat_dim, n_hidden),
        "b1_0": jnp.zeros((n_hidden,), jnp.float32),
        "w2_0": xavier_uniform(k[1], n_hidden, n_hidden),
        "b2_0": jnp.zeros((n_hidden,), jnp.float32),
        "w1_1": xavier_uniform(k[2], n_hidden, n_hidden),
        "b1_1": jnp.zeros((n_hidden,), jnp.float32),
        "w2_1": xavier_uniform(k[3], n_hidden, n_hidden),
        "b2_1": jnp.zeros((n_hidden,), jnp.float32),
    }


# ----------------------------------------------------------------------------
# Encoder.forward equivalent: one fused kernel call -> (g, g1, g2)
# ----------------------------------------------------------------------------
@jax.jit
def encoder_forward(x, a_hat, P, params, key):
    N, F = x.shape
    G = P.shape[0]
    H = params["w2_0"].shape[1]

    # Augmented views: per-element feature dropout, drawn outside the kernel.
    # TODO(synk): the original Encoder composes randomly-selected graph
    # augmentors (randperm over self.aug1/self.aug2: feature masking, edge
    # dropping, ...); here both augmented views use feature dropout, and the
    # `perturb` argument of the first encoder call is not supported.
    k1, k2 = jax.random.split(key)
    keep1 = jax.random.bernoulli(k1, 1.0 - DROP_P, x.shape)
    keep2 = jax.random.bernoulli(k2, 1.0 - DROP_P, x.shape)
    x_views = jnp.stack(
        [x, jnp.where(keep1, x, 0.0), jnp.where(keep2, x, 0.0)],
        axis=0).astype(jnp.bfloat16)

    a_bf = a_hat.astype(jnp.bfloat16)
    p_bf = P.astype(jnp.bfloat16)
    w1_0 = params["w1_0"].astype(jnp.bfloat16)
    w2_0 = params["w2_0"].astype(jnp.bfloat16)
    w1_1 = params["w1_1"].astype(jnp.bfloat16)
    w2_1 = params["w2_1"].astype(jnp.bfloat16)
    biases = jnp.stack(
        [params["b1_0"], params["b2_0"], params["b1_1"], params["b2_1"]], axis=0)

    out = _make_gconv3(N, F, H, G)(
        x_views, a_bf, p_bf, w1_0, w2_0, w1_1, w2_1, biases)

    g_all = out[:, :, : NUM_LAYERS * H]       # strip lane padding
    return g_all[0], g_all[1], g_all[2]       # (g, g1, g2)


# ----------------------------------------------------------------------------
# main
# ----------------------------------------------------------------------------
if __name__ == "__main__":
    key = jax.random.PRNGKey(0)
    k_x, k_w, k_aug = jax.random.split(key, 3)

    # Small synthetic graph batch: 2 graphs x 8 nodes each, feat_dim=8, hidden=32
    N, F, H, G = 16, 8, 32, 2
    nodes_per_graph = N // G

    x = jax.random.normal(k_x, (N, F), jnp.float32)

    # edge_index: a ring within each graph (undirected), densified; A_hat = A + I
    idx = jnp.arange(N)
    nxt = ((idx // nodes_per_graph) * nodes_per_graph
           + (idx % nodes_per_graph + 1) % nodes_per_graph)
    A = jnp.zeros((N, N), jnp.float32).at[idx, nxt].set(1.0).at[nxt, idx].set(1.0)
    A_hat = A + jnp.eye(N, dtype=jnp.float32)

    # batch vector -> one-hot pooling matrix P[g, n] = 1 if node n in graph g
    batch = idx // nodes_per_graph
    P = (batch[None, :] == jnp.arange(G)[:, None]).astype(jnp.float32)

    params = init_gconv_params(k_w, F, H)

    g, g1, g2 = encoder_forward(x, A_hat, P, params, k_aug)
    jax.block_until_ready((g, g1, g2))

    out_dim = NUM_LAYERS * H
    assert g.shape == (G, out_dim) and g1.shape == (G, out_dim) and g2.shape == (G, out_dim)
    assert bool(jnp.all(jnp.isfinite(g)))
    assert bool(jnp.all(jnp.isfinite(g1)))
    assert bool(jnp.all(jnp.isfinite(g2)))
    print("KERNEL_OK")
</pallas_src>

<mosaic_0001>
module attributes {stable_mosaic.version = 11 : i64} {
  func.func @_gconv3_kernel(%arg0: i32, %arg1: memref<1x16x8xbf16, #tpu.memory_space<vmem>>, %arg2: memref<16x16xbf16, #tpu.memory_space<vmem>>, %arg3: memref<2x16xbf16, #tpu.memory_space<vmem>>, %arg4: memref<8x32xbf16, #tpu.memory_space<vmem>>, %arg5: memref<32x32xbf16, #tpu.memory_space<vmem>>, %arg6: memref<32x32xbf16, #tpu.memory_space<vmem>>, %arg7: memref<32x32xbf16, #tpu.memory_space<vmem>>, %arg8: memref<4x32xf32, #tpu.memory_space<vmem>>, %arg9: memref<1x2x128xf32, #tpu.memory_space<vmem>>) attributes {dimension_semantics = [#tpu.dimension_semantics<parallel>], iteration_bounds = array<i64: 3>, scalar_prefetch = 0 : i64, scratch_operands = 0 : i64, tpu.core_type = #tpu.core_type<tc>, window_params = [{transform_indices = @transform_0, window_bounds = array<i64: 1, 16, 8>}, {pipeline_mode = #tpu.pipeline_mode<synchronous>, transform_indices = @transform_1, window_bounds = array<i64: 16, 16>}, {pipeline_mode = #tpu.pipeline_mode<synchronous>, transform_indices = @transform_2, window_bounds = array<i64: 2, 16>}, {pipeline_mode = #tpu.pipeline_mode<synchronous>, transform_indices = @transform_3, window_bounds = array<i64: 8, 32>}, {pipeline_mode = #tpu.pipeline_mode<synchronous>, transform_indices = @transform_4, window_bounds = array<i64: 32, 32>}, {pipeline_mode = #tpu.pipeline_mode<synchronous>, transform_indices = @transform_5, window_bounds = array<i64: 32, 32>}, {pipeline_mode = #tpu.pipeline_mode<synchronous>, transform_indices = @transform_6, window_bounds = array<i64: 32, 32>}, {pipeline_mode = #tpu.pipeline_mode<synchronous>, transform_indices = @transform_7, window_bounds = array<i64: 4, 32>}, {transform_indices = @transform_8, window_bounds = array<i64: 1, 2, 128>}]} {
    %c0 = arith.constant 0 : index
    %c0_0 = arith.constant 0 : index
    %0 = vector.load %arg2[%c0, %c0_0] : memref<16x16xbf16, #tpu.memory_space<vmem>>, vector<16x16xbf16>
    %c0_1 = arith.constant 0 : index
    %c0_2 = arith.constant 0 : index
    %1 = vector.load %arg3[%c0_1, %c0_2] : memref<2x16xbf16, #tpu.memory_space<vmem>>, vector<2x16xbf16>
    %c0_3 = arith.constant 0 : index
    %c0_4 = arith.constant 0 : index
    %2 = vector.load %arg8[%c0_3, %c0_4] : memref<4x32xf32, #tpu.memory_space<vmem>>, vector<1x32xf32>
    %c1 = arith.constant 1 : index
    %c0_5 = arith.constant 0 : index
    %3 = vector.load %arg8[%c1, %c0_5] : memref<4x32xf32, #tpu.memory_space<vmem>>, vector<1x32xf32>
    %c2 = arith.constant 2 : index
    %c0_6 = arith.constant 0 : index
    %4 = vector.load %arg8[%c2, %c0_6] : memref<4x32xf32, #tpu.memory_space<vmem>>, vector<1x32xf32>
    %c3 = arith.constant 3 : index
    %c0_7 = arith.constant 0 : index
    %5 = vector.load %arg8[%c3, %c0_7] : memref<4x32xf32, #tpu.memory_space<vmem>>, vector<1x32xf32>
    %c0_8 = arith.constant 0 : index
    %c0_9 = arith.constant 0 : index
    %c0_10 = arith.constant 0 : index
    %6 = vector.load %arg1[%c0_8, %c0_9, %c0_10] : memref<1x16x8xbf16, #tpu.memory_space<vmem>>, vector<1x16x8xbf16>
    %7 = vector.shape_cast %6 : vector<1x16x8xbf16> to vector<16x8xbf16>
    %cst = arith.constant dense<0.000000e+00> : vector<16x8xf32>
    %8 = tpu.matmul %0, %7, %cst {dimension_numbers = #tpu.dot_dimension_numbers<[1], [0], [0], [1], [0, 0, 1, 1], [], []>} : vector<16x16xbf16>, vector<16x8xbf16>, vector<16x8xf32> -> vector<16x8xf32>
    %9 = arith.truncf %8 : vector<16x8xf32> to vector<16x8xbf16>
    %c0_11 = arith.constant 0 : index
    %c0_12 = arith.constant 0 : index
    %10 = vector.load %arg4[%c0_11, %c0_12] : memref<8x32xbf16, #tpu.memory_space<vmem>>, vector<8x32xbf16>
    %cst_13 = arith.constant dense<0.000000e+00> : vector<16x32xf32>
    %11 = tpu.matmul %9, %10, %cst_13 {dimension_numbers = #tpu.dot_dimension_numbers<[1], [0], [0], [1], [0, 0, 1, 1], [], []>} : vector<16x8xbf16>, vector<8x32xbf16>, vector<16x32xf32> -> vector<16x32xf32>
    %12 = vector.broadcast %2 : vector<1x32xf32> to vector<16x32xf32>
    %13 = arith.addf %11, %12 : vector<16x32xf32>
    %cst_14 = arith.constant 0.000000e+00 : f32
    %14 = vector.broadcast %cst_14 : f32 to vector<16x32xf32>
    %15 = arith.maximumf %13, %14 : vector<16x32xf32>
    %16 = arith.truncf %15 : vector<16x32xf32> to vector<16x32xbf16>
    %c0_15 = arith.constant 0 : index
    %c0_16 = arith.constant 0 : index
    %17 = vector.load %arg5[%c0_15, %c0_16] : memref<32x32xbf16, #tpu.memory_space<vmem>>, vector<32x32xbf16>
    %cst_17 = arith.constant dense<0.000000e+00> : vector<16x32xf32>
    %18 = tpu.matmul %16, %17, %cst_17 {dimension_numbers = #tpu.dot_dimension_numbers<[1], [0], [0], [1], [0, 0, 1, 1], [], []>} : vector<16x32xbf16>, vector<32x32xbf16>, vector<16x32xf32> -> vector<16x32xf32>
    %19 = vector.broadcast %3 : vector<1x32xf32> to vector<16x32xf32>
    %20 = arith.addf %18, %19 : vector<16x32xf32>
    %cst_18 = arith.constant 0.000000e+00 : f32
    %21 = vector.broadcast %cst_18 : f32 to vector<16x32xf32>
    %22 = arith.maximumf %20, %21 : vector<16x32xf32>
    %cst_19 = arith.constant dense<0.000000e+00> : vector<32xf32>
    %23 = vector.multi_reduction <add>, %22, %cst_19 [0] : vector<16x32xf32> to vector<32xf32>
    %24 = vector.shape_cast %23 : vector<32xf32> to vector<1x32xf32>
    %cst_20 = arith.constant 6.250000e-02 : f32
    %25 = vector.broadcast %cst_20 : f32 to vector<1x32xf32>
    %26 = arith.mulf %24, %25 : vector<1x32xf32>
    %27 = arith.mulf %22, %22 : vector<16x32xf32>
    %cst_21 = arith.constant dense<0.000000e+00> : vector<32xf32>
    %28 = vector.multi_reduction <add>, %27, %cst_21 [0] : vector<16x32xf32> to vector<32xf32>
    %29 = vector.shape_cast %28 : vector<32xf32> to vector<1x32xf32>
    %cst_22 = arith.constant 6.250000e-02 : f32
    %30 = vector.broadcast %cst_22 : f32 to vector<1x32xf32>
    %31 = arith.mulf %29, %30 : vector<1x32xf32>
    %32 = arith.mulf %26, %26 : vector<1x32xf32>
    %33 = arith.subf %31, %32 : vector<1x32xf32>
    %cst_23 = arith.constant 0.000000e+00 : f32
    %34 = vector.broadcast %cst_23 : f32 to vector<1x32xf32>
    %35 = arith.maximumf %33, %34 : vector<1x32xf32>
    %36 = vector.broadcast %26 : vector<1x32xf32> to vector<16x32xf32>
    %37 = arith.subf %22, %36 : vector<16x32xf32>
    %cst_24 = arith.constant 9.99999974E-6 : f32
    %38 = vector.broadcast %cst_24 : f32 to vector<1x32xf32>
    %39 = arith.addf %35, %38 : vector<1x32xf32>
    %40 = math.rsqrt %39 : vector<1x32xf32>
    %41 = vector.broadcast %40 : vector<1x32xf32> to vector<16x32xf32>
    %42 = arith.mulf %37, %41 : vector<16x32xf32>
    %43 = arith.truncf %42 : vector<16x32xf32> to vector<16x32xbf16>
    %cst_25 = arith.constant dense<0.000000e+00> : vector<16x32xf32>
    %44 = tpu.matmul %0, %43, %cst_25 {dimension_numbers = #tpu.dot_dimension_numbers<[1], [0], [0], [1], [0, 0, 1, 1], [], []>} : vector<16x16xbf16>, vector<16x32xbf16>, vector<16x32xf32> -> vector<16x32xf32>
    %45 = arith.truncf %44 : vector<16x32xf32> to vector<16x32xbf16>
    %c0_26 = arith.constant 0 : index
    %c0_27 = arith.constant 0 : index
    %46 = vector.load %arg6[%c0_26, %c0_27] : memref<32x32xbf16, #tpu.memory_space<vmem>>, vector<32x32xbf16>
    %cst_28 = arith.constant dense<0.000000e+00> : vector<16x32xf32>
    %47 = tpu.matmul %45, %46, %cst_28 {dimension_numbers = #tpu.dot_dimension_numbers<[1], [0], [0], [1], [0, 0, 1, 1], [], []>} : vector<16x32xbf16>, vector<32x32xbf16>, vector<16x32xf32> -> vector<16x32xf32>
    %48 = vector.broadcast %4 : vector<1x32xf32> to vector<16x32xf32>
    %49 = arith.addf %47, %48 : vector<16x32xf32>
    %cst_29 = arith.constant 0.000000e+00 : f32
    %50 = vector.broadcast %cst_29 : f32 to vector<16x32xf32>
    %51 = arith.maximumf %49, %50 : vector<16x32xf32>
    %52 = arith.truncf %51 : vector<16x32xf32> to vector<16x32xbf16>
    %c0_30 = arith.constant 0 : index
    %c0_31 = arith.constant 0 : index
    %53 = vector.load %arg7[%c0_30, %c0_31] : memref<32x32xbf16, #tpu.memory_space<vmem>>, vector<32x32xbf16>
    %cst_32 = arith.constant dense<0.000000e+00> : vector<16x32xf32>
    %54 = tpu.matmul %52, %53, %cst_32 {dimension_numbers = #tpu.dot_dimension_numbers<[1], [0], [0], [1], [0, 0, 1, 1], [], []>} : vector<16x32xbf16>, vector<32x32xbf16>, vector<16x32xf32> -> vector<16x32xf32>
    %55 = vector.broadcast %5 : vector<1x32xf32> to vector<16x32xf32>
    %56 = arith.addf %54, %55 : vector<16x32xf32>
    %cst_33 = arith.constant 0.000000e+00 : f32
    %57 = vector.broadcast %cst_33 : f32 to vector<16x32xf32>
    %58 = arith.maximumf %56, %57 : vector<16x32xf32>
    %cst_34 = arith.constant dense<0.000000e+00> : vector<32xf32>
    %59 = vector.multi_reduction <add>, %58, %cst_34 [0] : vector<16x32xf32> to vector<32xf32>
    %60 = vector.shape_cast %59 : vector<32xf32> to vector<1x32xf32>
    %cst_35 = arith.constant 6.250000e-02 : f32
    %61 = vector.broadcast %cst_35 : f32 to vector<1x32xf32>
    %62 = arith.mulf %60, %61 : vector<1x32xf32>
    %63 = arith.mulf %58, %58 : vector<16x32xf32>
    %cst_36 = arith.constant dense<0.000000e+00> : vector<32xf32>
    %64 = vector.multi_reduction <add>, %63, %cst_36 [0] : vector<16x32xf32> to vector<32xf32>
    %65 = vector.shape_cast %64 : vector<32xf32> to vector<1x32xf32>
    %cst_37 = arith.constant 6.250000e-02 : f32
    %66 = vector.broadcast %cst_37 : f32 to vector<1x32xf32>
    %67 = arith.mulf %65, %66 : vector<1x32xf32>
    %68 = arith.mulf %62, %62 : vector<1x32xf32>
    %69 = arith.subf %67, %68 : vector<1x32xf32>
    %cst_38 = arith.constant 0.000000e+00 : f32
    %70 = vector.broadcast %cst_38 : f32 to vector<1x32xf32>
    %71 = arith.maximumf %69, %70 : vector<1x32xf32>
    %72 = vector.broadcast %62 : vector<1x32xf32> to vector<16x32xf32>
    %73 = arith.subf %58, %72 : vector<16x32xf32>
    %cst_39 = arith.constant 9.99999974E-6 : f32
    %74 = vector.broadcast %cst_39 : f32 to vector<1x32xf32>
    %75 = arith.addf %71, %74 : vector<1x32xf32>
    %76 = math.rsqrt %75 : vector<1x32xf32>
    %77 = vector.broadcast %76 : vector<1x32xf32> to vector<16x32xf32>
    %78 = arith.mulf %73, %77 : vector<16x32xf32>
    %79 = arith.truncf %42 : vector<16x32xf32> to vector<16x32xbf16>
    %cst_40 = arith.constant dense<0.000000e+00> : vector<2x32xf32>
    %80 = tpu.matmul %1, %79, %cst_40 {dimension_numbers = #tpu.dot_dimension_numbers<[1], [0], [0], [1], [0, 0, 1, 1], [], []>} : vector<2x16xbf16>, vector<16x32xbf16>, vector<2x32xf32> -> vector<2x32xf32>
    %81 = arith.truncf %78 : vector<16x32xf32> to vector<16x32xbf16>
    %cst_41 = arith.constant dense<0.000000e+00> : vector<2x32xf32>
    %82 = tpu.matmul %1, %81, %cst_41 {dimension_numbers = #tpu.dot_dimension_numbers<[1], [0], [0], [1], [0, 0, 1, 1], [], []>} : vector<2x16xbf16>, vector<16x32xbf16>, vector<2x32xf32> -> vector<2x32xf32>
    %cst_42 = arith.constant 0.000000e+00 : f32
    %83 = vector.broadcast %cst_42 : f32 to vector<2x64xf32>
    %84 = tpu.concatenate %80, %82, %83 in 1 : vector<2x32xf32>, vector<2x32xf32>, vector<2x64xf32> -> vector<2x128xf32>
    %c0_43 = arith.constant 0 : index
    %c0_44 = arith.constant 0 : index
    %c0_45 = arith.constant 0 : index
    %85 = vector.load %arg9[%c0_43, %c0_44, %c0_45] : memref<1x2x128xf32, #tpu.memory_space<vmem>>, vector<1x2x128xf32>
    %86 = vector.shape_cast %85 : vector<1x2x128xf32> to vector<2x128xf32>
    %87 = vector.shape_cast %84 : vector<2x128xf32> to vector<1x2x128xf32>
    tpu.vector_store %arg9[%c0_43, %c0_44, %c0_45], %87 {strides = array<i32>} : memref<1x2x128xf32, #tpu.memory_space<vmem>>, vector<1x2x128xf32>,
    return
  }
  func.func @transform_0(%arg0: i32) -> (i32, i32, i32) {
    %c0_i32 = arith.constant 0 : i32
    %c0_i32_0 = arith.constant 0 : i32
    %c0_i32_1 = arith.constant 0 : i32
    return %arg0, %c0_i32, %c0_i32_0 : i32, i32, i32
  }
  func.func @transform_1(%arg0: i32) -> (i32, i32) {
    %c0_i32 = arith.constant 0 : i32
    %c0_i32_0 = arith.constant 0 : i32
    %c0_i32_1 = arith.constant 0 : i32
    return %c0_i32, %c0_i32_0 : i32, i32
  }
  func.func @transform_2(%arg0: i32) -> (i32, i32) {
    %c0_i32 = arith.constant 0 : i32
    %c0_i32_0 = arith.constant 0 : i32
    %c0_i32_1 = arith.constant 0 : i32
    return %c0_i32, %c0_i32_0 : i32, i32
  }
  func.func @transform_3(%arg0: i32) -> (i32, i32) {
    %c0_i32 = arith.constant 0 : i32
    %c0_i32_0 = arith.constant 0 : i32
    %c0_i32_1 = arith.constant 0 : i32
    return %c0_i32, %c0_i32_0 : i32, i32
  }
  func.func @transform_4(%arg0: i32) -> (i32, i32) {
    %c0_i32 = arith.constant 0 : i32
    %c0_i32_0 = arith.constant 0 : i32
    %c0_i32_1 = arith.constant 0 : i32
    return %c0_i32, %c0_i32_0 : i32, i32
  }
  func.func @transform_5(%arg0: i32) -> (i32, i32) {
    %c0_i32 = arith.constant 0 : i32
    %c0_i32_0 = arith.constant 0 : i32
    %c0_i32_1 = arith.constant 0 : i32
    return %c0_i32, %c0_i32_0 : i32, i32
  }
  func.func @transform_6(%arg0: i32) -> (i32, i32) {
    %c0_i32 = arith.constant 0 : i32
    %c0_i32_0 = arith.constant 0 : i32
    %c0_i32_1 = arith.constant 0 : i32
    return %c0_i32, %c0_i32_0 : i32, i32
  }
  func.func @transform_7(%arg0: i32) -> (i32, i32) {
    %c0_i32 = arith.constant 0 : i32
    %c0_i32_0 = arith.constant 0 : i32
    %c0_i32_1 = arith.constant 0 : i32
    return %c0_i32, %c0_i32_0 : i32, i32
  }
  func.func @transform_8(%arg0: i32) -> (i32, i32, i32) {
    %c0_i32 = arith.constant 0 : i32
    %c0_i32_0 = arith.constant 0 : i32
    %c0_i32_1 = arith.constant 0 : i32
    return %arg0, %c0_i32, %c0_i32_0 : i32, i32, i32
  }
}

</mosaic_0001>

<llo_original>
// kernel: encoder_forward.3
$region0: #{encoder_forward.3}
  #allocation0 [shape = 'u32[]', space=smem, size = 0x4, offset = 0x4, fixed_abs, tag = 'smem constant byte address 0x4 - core index']
  #allocation1 [shape = 'u32[72,128]{1,0:T(1,128)}', space=vmem, size = 0x9000, scoped, tag = 'internal scratch']
  %s0 = inlined_call_operand.vmem [shape: bf16[3,16,8], index: 0, kind: input, shape index: {}]
  %s1 = inlined_call_operand.vmem [shape: bf16[16,16], index: 1, kind: input, shape index: {}]
  %s2 = inlined_call_operand.vmem [shape: bf16[2,16], index: 2, kind: input, shape index: {}]
  %s3 = inlined_call_operand.vmem [shape: bf16[8,32], index: 3, kind: input, shape index: {}]
  %s4 = inlined_call_operand.vmem [shape: bf16[32,32], index: 4, kind: input, shape index: {}]
  %s5 = inlined_call_operand.vmem [shape: bf16[32,32], index: 5, kind: input, shape index: {}]
  %s6 = inlined_call_operand.vmem [shape: bf16[32,32], index: 6, kind: input, shape index: {}]
  %s7 = inlined_call_operand.vmem [shape: f32[4,32], index: 7, kind: input, shape index: {}]
  %s8 = inlined_call_operand.vmem [shape: f32[3,2,128], index: 8, kind: output, shape index: {}]
  %s9 = sld [smem:[#allocation0]]
  $region65: #{encoder_forward.3} parent=0
    _
  %s11 = ssub.s32 1, %s9
  %s12 = scalar_select 0, %s11, %s9
  loop: start=0, step=1, limit=5
  $region2: #{encoder_forward.3} parent=0 // loop_pre_header
    _
  $region3: #{encoder_forward.3} parent=0 // loop_header
    %s14 = sphi 0, %s18
    %p15 = scmp.ge.s32.totalorder %s14, 5
    %s24 = sphi 0, %s26
    %s27 = sphi 0, %s24
    %s28 = sphi 0, %s27
    %s44 = sphi 0, %s28
    %s48 = sphi 0, %s48
    %s50 = sphi 0, %s48
    %s51 = sphi 0, %s50
    %s65 = sphi 0, %s51
    %s69 = sphi 0, %s69
    %s71 = sphi 0, %s69
    %s72 = sphi 0, %s71
    %s86 = sphi 0, %s72
    %s90 = sphi 0, %s90
    %s92 = sphi 0, %s90
    %s93 = sphi 0, %s92
    %s107 = sphi 0, %s93
    %s111 = sphi 0, %s111
    %s113 = sphi 0, %s111
    %s114 = sphi 0, %s113
    %s128 = sphi 0, %s114
    %s132 = sphi 0, %s132
    %s134 = sphi 0, %s132
    %s135 = sphi 0, %s134
    %s149 = sphi 0, %s135
    %s153 = sphi 0, %s153
    %s155 = sphi 0, %s153
    %s156 = sphi 0, %s155
    %s170 = sphi 0, %s156
    %s174 = sphi 0, %s174
    %s176 = sphi 0, %s174
    %s177 = sphi 0, %s176
    %s191 = sphi 0, %s177
    %s197 = sphi 0, %s199
    %s200 = sphi 0, %s197
    %s201 = sphi 0, %s200
    %s217 = sphi 0, %s201
  $region4: #{encoder_forward.3} parent=0 // loop_header_branch
    %17 = sbr.rel (%p15) target = $region8
  $region5: #{encoder_forward.3} parent=0 // loop_body
    %s19 = ssub.s32 %s14, 1
    %s20 = ssub.s32 %s14, 2
    %s21 = sadd.s32 %s14, 1
    %s22 = ssub.s32 %s14, %s21
    %p23 = scmp.eq.s32.totalorder %s22, 0
    %s25 = sadd.s32 %s24, 1
    %s26 = scalar_select %p23, %s24, %s25
    %p29 = pneg %p23
    %p30 = scmp.eq.s32.totalorder %s14, 2
    %p31 = por %p29, %p30
    %p32 = scmp.ne.s32.totalorder %s24, %s27
    %p33 = scmp.eq.s32.totalorder %s14, 0
    %p34 = por %p32, %p33
    %p35 = scmp.ne.s32.totalorder %s24, %s27
    %p36 = scmp.eq.s32.totalorder %s19, 2
    %p37 = por %p35, %p36
    %p38 = scmp.ne.s32.totalorder %s27, %s28
    %p39 = scmp.eq.s32.totalorder %s19, 0
    %p40 = por %p38, %p39
    %p41 = scmp.ne.s32.totalorder %s27, %s28
    %p42 = scmp.eq.s32.totalorder %s20, 2
    %p43 = por %p41, %p42
    %p45 = scmp.ne.s32.totalorder %s28, %s44
    %p46 = scmp.eq.s32.totalorder %s20, 0
    %p47 = por %p45, %p46
    %s49 = sadd.s32 %s48, 1
    %p52 = scmp.eq.s32.totalorder %s14, 2
    %p53 = scmp.ne.s32.totalorder %s48, %s50
    %p54 = scmp.eq.s32.totalorder %s14, 0
    %p55 = por %p53, %p54
    %p56 = scmp.ne.s32.totalorder %s48, %s50
    %p57 = scmp.eq.s32.totalorder %s19, 2
    %p58 = por %p56, %p57
    %p59 = scmp.ne.s32.totalorder %s50, %s51
    %p60 = scmp.eq.s32.totalorder %s19, 0
    %p61 = por %p59, %p60
    %p62 = scmp.ne.s32.totalorder %s50, %s51
    %p63 = scmp.eq.s32.totalorder %s20, 2
    %p64 = por %p62, %p63
    %p66 = scmp.ne.s32.totalorder %s51, %s65
    %p67 = scmp.eq.s32.totalorder %s20, 0
    %p68 = por %p66, %p67
    %s70 = sadd.s32 %s69, 1
    %p73 = scmp.eq.s32.totalorder %s14, 2
    %p74 = scmp.ne.s32.totalorder %s69, %s71
    %p75 = scmp.eq.s32.totalorder %s14, 0
    %p76 = por %p74, %p75
    %p77 = scmp.ne.s32.totalorder %s69, %s71
    %p78 = scmp.eq.s32.totalorder %s19, 2
    %p79 = por %p77, %p78
    %p80 = scmp.ne.s32.totalorder %s71, %s72
    %p81 = scmp.eq.s32.totalorder %s19, 0
    %p82 = por %p80, %p81
    %p83 = scmp.ne.s32.totalorder %s71, %s72
    %p84 = scmp.eq.s32.totalorder %s20, 2
    %p85 = por %p83, %p84
    %p87 = scmp.ne.s32.totalorder %s72, %s86
    %p88 = scmp.eq.s32.totalorder %s20, 0
    %p89 = por %p87, %p88
    %s91 = sadd.s32 %s90, 1
    %p94 = scmp.eq.s32.totalorder %s14, 2
    %p95 = scmp.ne.s32.totalorder %s90, %s92
    %p96 = scmp.eq.s32.totalorder %s14, 0
    %p97 = por %p95, %p96
    %p98 = scmp.ne.s32.totalorder %s90, %s92
    %p99 = scmp.eq.s32.totalorder %s19, 2
    %p100 = por %p98, %p99
    %p101 = scmp.ne.s32.totalorder %s92, %s93
    %p102 = scmp.eq.s32.totalorder %s19, 0
    %p103 = por %p101, %p102
    %p104 = scmp.ne.s32.totalorder %s92, %s93
    %p105 = scmp.eq.s32.totalorder %s20, 2
    %p106 = por %p104, %p105
    %p108 = scmp.ne.s32.totalorder %s93, %s107
    %p109 = scmp.eq.s32.totalorder %s20, 0
    %p110 = por %p108, %p109
    %s112 = sadd.s32 %s111, 1
    %p115 = scmp.eq.s32.totalorder %s14, 2
    %p116 = scmp.ne.s32.totalorder %s111, %s113
    %p117 = scmp.eq.s32.totalorder %s14, 0
    %p118 = por %p116, %p117
    %p119 = scmp.ne.s32.totalorder %s111, %s113
    %p120 = scmp.eq.s32.totalorder %s19, 2
    %p121 = por %p119, %p120
    %p122 = scmp.ne.s32.totalorder %s113, %s114
    %p123 = scmp.eq.s32.totalorder %s19, 0
    %p124 = por %p122, %p123
    %p125 = scmp.ne.s32.totalorder %s113, %s114
    %p126 = scmp.eq.s32.totalorder %s20, 2
    %p127 = por %p125, %p126
    %p129 = scmp.ne.s32.totalorder %s114, %s128
    %p130 = scmp.eq.s32.totalorder %s20, 0
    %p131 = por %p129, %p130
    %s133 = sadd.s32 %s132, 1
    %p136 = scmp.eq.s32.totalorder %s14, 2
    %p137 = scmp.ne.s32.totalorder %s132, %s134
    %p138 = scmp.eq.s32.totalorder %s14, 0
    %p139 = por %p137, %p138
    %p140 = scmp.ne.s32.totalorder %s132, %s134
    %p141 = scmp.eq.s32.totalorder %s19, 2
    %p142 = por %p140, %p141
    %p143 = scmp.ne.s32.totalorder %s134, %s135
    %p144 = scmp.eq.s32.totalorder %s19, 0
    %p145 = por %p143, %p144
    %p146 = scmp.ne.s32.totalorder %s134, %s135
    %p147 = scmp.eq.s32.totalorder %s20, 2
    %p148 = por %p146, %p147
    %p150 = scmp.ne.s32.totalorder %s135, %s149
    %p151 = scmp.eq.s32.totalorder %s20, 0
    %p152 = por %p150, %p151
    %s154 = sadd.s32 %s153, 1
    %p157 = scmp.eq.s32.totalorder %s14, 2
    %p158 = scmp.ne.s32.totalorder %s153, %s155
    %p159 = scmp.eq.s32.totalorder %s14, 0
    %p160 = por %p158, %p159
    %p161 = scmp.ne.s32.totalorder %s153, %s155
    %p162 = scmp.eq.s32.totalorder %s19, 2
    %p163 = por %p161, %p162
    %p164 = scmp.ne.s32.totalorder %s155, %s156
    %p165 = scmp.eq.s32.totalorder %s19, 0
    %p166 = por %p164, %p165
    %p167 = scmp.ne.s32.totalorder %s155, %s156
    %p168 = scmp.eq.s32.totalorder %s20, 2
    %p169 = por %p167, %p168
    %p171 = scmp.ne.s32.totalorder %s156, %s170
    %p172 = scmp.eq.s32.totalorder %s20, 0
    %p173 = por %p171, %p172
    %s175 = sadd.s32 %s174, 1
    %p178 = scmp.eq.s32.totalorder %s14, 2
    %p179 = scmp.ne.s32.totalorder %s174, %s176
    %p180 = scmp.eq.s32.totalorder %s14, 0
    %p181 = por %p179, %p180
    %p182 = scmp.ne.s32.totalorder %s174, %s176
    %p183 = scmp.eq.s32.totalorder %s19, 2
    %p184 = por %p182, %p183
    %p185 = scmp.ne.s32.totalorder %s176, %s177
    %p186 = scmp.eq.s32.totalorder %s19, 0
    %p187 = por %p185, %p186
    %p188 = scmp.ne.s32.totalorder %s176, %s177
    %p189 = scmp.eq.s32.totalorder %s20, 2
    %p190 = por %p188, %p189
    %p192 = scmp.ne.s32.totalorder %s177, %s191
    %p193 = scmp.eq.s32.totalorder %s20, 0
    %p194 = por %p192, %p193
    %s195 = ssub.s32 %s14, %s21
    %p196 = scmp.eq.s32.totalorder %s195, 0
    %s198 = sadd.s32 %s197, 1
    %s199 = scalar_select %p196, %s197, %s198
    %p202 = pneg %p196
    %p203 = scmp.eq.s32.totalorder %s14, 2
    %p204 = por %p202, %p203
    %p205 = scmp.ne.s32.totalorder %s197, %s200
    %p206 = scmp.eq.s32.totalorder %s14, 0
    %p207 = por %p205, %p206
    %p208 = scmp.ne.s32.totalorder %s197, %s200
    %p209 = scmp.eq.s32.totalorder %s19, 2
    %p210 = por %p208, %p209
    %p211 = scmp.ne.s32.totalorder %s200, %s201
    %p212 = scmp.eq.s32.totalorder %s19, 0
    %p213 = por %p211, %p212
    %p214 = scmp.ne.s32.totalorder %s200, %s201
    %p215 = scmp.eq.s32.totalorder %s20, 2
    %p216 = por %p214, %p215
    %p218 = scmp.ne.s32.totalorder %s201, %s217
    %p219 = scmp.eq.s32.totalorder %s20, 0
    %p220 = por %p218, %p219
    %p221 = scmp.le.s32.totalorder 1, %s14
    %p222 = scmp.lt.s32.totalorder %s14, 4
    %p223 = pnand %p221, %p222
    %p224 = pneg %p223
    // Predicated region
    $region9: #{encoder_forward.3} parent=5 // pred_check
      _
    $region10: #{encoder_forward.3} parent=5 // pred_check_branch
      %226 = sbr.rel (%p223) target = $region12
    $region11: #{encoder_forward.3} parent=5 // pred_region
      %s227 = ssub.s32 %s14, 1
      // Predicated region
      $region13: #{encoder_forward.3} parent=11 // pred_check
        %p228 = pneg %p61
      $region14: #{encoder_forward.3} parent=11 // pred_check_branch
        %230 = sbr.rel (%p228) target = $region16
      $region15: #{encoder_forward.3} parent=11 // pred_region
        _
      $region16: #{encoder_forward.3} parent=11 // pred_fallthru
        _
      // Predicated region
      $region17: #{encoder_forward.3} parent=11 // pred_check
        %p231 = pneg %p82
      $region18: #{encoder_forward.3} parent=11 // pred_check_branch
        %233 = sbr.rel (%p231) target = $region20
      $region19: #{encoder_forward.3} parent=11 // pred_region
        _
      $region20: #{encoder_forward.3} parent=11 // pred_fallthru
        _
      // Predicated region
      $region21: #{encoder_forward.3} parent=11 // pred_check
        %p234 = pneg %p103
      $region22: #{encoder_forward.3} parent=11 // pred_check_branch
        %236 = sbr.rel (%p234) target = $region24
      $region23: #{encoder_forward.3} parent=11 // pred_region
        _
      $region24: #{encoder_forward.3} parent=11 // pred_fallthru
        _
      // Predicated region
      $region25: #{encoder_forward.3} parent=11 // pred_check
        %p237 = pneg %p124
      $region26: #{encoder_forward.3} parent=11 // pred_check_branch
        %239 = sbr.rel (%p237) target = $region28
      $region27: #{encoder_forward.3} parent=11 // pred_region
        _
      $region28: #{encoder_forward.3} parent=11 // pred_fallthru
        _
      // Predicated region
      $region29: #{encoder_forward.3} parent=11 // pred_check
        %p240 = pneg %p145
      $region30: #{encoder_forward.3} parent=11 // pred_check_branch
        %242 = sbr.rel (%p240) target = $region32
      $region31: #{encoder_forward.3} parent=11 // pred_region
        _
      $region32: #{encoder_forward.3} parent=11 // pred_fallthru
        _
      // Predicated region
      $region33: #{encoder_forward.3} parent=11 // pred_check
        %p243 = pneg %p166
      $region34: #{encoder_forward.3} parent=11 // pred_check_branch
        %245 = sbr.rel (%p243) target = $region36
      $region35: #{encoder_forward.3} parent=11 // pred_region
        _
      $region36: #{encoder_forward.3} parent=11 // pred_fallthru
        _
      // Predicated region
      $region37: #{encoder_forward.3} parent=11 // pred_check
        %p246 = pneg %p187
      $region38: #{encoder_forward.3} parent=11 // pred_check_branch
        %248 = sbr.rel (%p246) target = $region40
      $region39: #{encoder_forward.3} parent=11 // pred_region
        _
      $region40: #{encoder_forward.3} parent=11 // pred_fallthru
        _
    $region12: #{encoder_forward.3} parent=5 // pred_fallthru
      _
    %p249 = scmp.lt.s32.totalorder %s14, 3
    // Predicated region
    $region41: #{encoder_forward.3} parent=5 // pred_check
      %p250 = pneg %p249
    $region42: #{encoder_forward.3} parent=5 // pred_check_branch
      %252 = sbr.rel (%p250) target = $region44
    $region43: #{encoder_forward.3} parent=5 // pred_region
      // Predicated region
      $region45: #{encoder_forward.3} parent=43 // pred_check
        %p253 = pneg %p34
      $region46: #{encoder_forward.3} parent=43 // pred_check_branch
        %255 = sbr.rel (%p253) target = $region48
      $region47: #{encoder_forward.3} parent=43 // pred_region
        %p256 = scmp.lt.s32.totalorder %s14, 2
        %s257 = scalar_select %p256, %s14, 2
        %s258 = smul.addr %s257, 2
        %s259 = smul.addr %s258, 4
        %s260 = scalar_lea.vmem %s0, %s259
      $region48: #{encoder_forward.3} parent=43 // pred_fallthru
        _
    $region44: #{encoder_forward.3} parent=5 // pred_fallthru
      _
    %p261 = scmp.le.s32.totalorder 1, %s14
    %p262 = scmp.lt.s32.totalorder %s14, 4
    %p263 = pnand %p261, %p262
    %p264 = pneg %p263
    // Predicated region
    $region49: #{encoder_forward.3} parent=5 // pred_check
      _
    $region50: #{encoder_forward.3} parent=5 // pred_check_branch
      %266 = sbr.rel (%p263) target = $region52
    $region51: #{encoder_forward.3} parent=5 // pred_region
      %s267 = ssub.s32 %s14, 1
      %p268 = scmp.lt.s32.totalorder %s19, 2
      %s269 = scalar_select %p268, %s19, 2
      %s270 = smul.addr %s269, 2
      %s271 = smul.addr %s270, 4
      %s272 = scalar_lea.vmem %s0, %s271
      %p273 = pneg %p40
      %p274 = pneg %p37
      %p275 = pneg %p61
      %p276 = pneg %p58
      %p277 = pneg %p82
      %p278 = pneg %p79
      %p279 = pneg %p103
      %p280 = pneg %p100
      %p281 = pneg %p124
      %p282 = pneg %p121
      %p283 = pneg %p145
      %p284 = pneg %p142
      %p285 = pneg %p166
      %p286 = pneg %p163
      %p287 = pneg %p187
      %p288 = pneg %p184
      %p289 = pneg %p213
      %p290 = pneg %p210
      %p291 = scmp.lt.s32.totalorder %s19, 2
      %s292 = scalar_select %p291, %s19, 2
      %s293 = smul.addr %s292, 2
      %s294 = scalar_lea.vmem %s8, %s293
      %p295 = scmp.lt.s32.totalorder %s19, 2
      %s296 = scalar_select %p295, %s19, 2
      %s297 = smul.addr %s296, 2
      %s298 = smul.addr %s297, 4
      %s299 = scalar_lea.vmem %s0, %s298
      %p300 = scmp.lt.s32.totalorder %s19, 2
      %s301 = scalar_select %p300, %s19, 2
      %s302 = smul.addr %s301, 2
      %s303 = scalar_lea.vmem %s8, %s302
      %v305 = vld [vmem:[%s1] sm:$0xf]
      %v306 = vld [vmem:[%s1 + $0x4] sm:$0xf]
      %v307 = vld [vmem:[%s2] sm:$0x1]
      %v308 = vld [vmem:[%s7] sm:$0x1]
      %v309 = vld [vmem:[%s7 + $0x1] sm:$0x1]
      %v310 = vld [vmem:[%s7 + $0x2] sm:$0x1]
      %v311 = vld [vmem:[%s7 + $0x3] sm:$0x1]
      %v312 = vld [vmem:[%s299] sm:$0xf]
      %v313 = vld [vmem:[%s299 + $0x4] sm:$0xf]
      %v316 = vunpack.c.l.b16 %v305
      %v317 = vunpack.c.l.b16 %v306
      %v318 = vpack.c.b16 %v317, %v316
      %v321 = vunpack.c.l.b16 %v312
      %v322 = vunpack.c.l.b16 %v313
      %v323 = vpack.c.b16 %v322, %v321
      %vm325 = vcmask 130048
      %v327 = vsel %vm325, %v318, 0
      %329 = vmatpush.bf16.msra.mxu0 0
      %330 = vmatpush.bf16.msra.mxu0 0
      %331 = vmatpush.bf16.msra.mxu0 0
      %332 = vmatpush.bf16.msra.mxu0 0
      %333 = vmatpush.bf16.msra.mxu0 0
      %334 = vmatpush.bf16.msra.mxu0 0
      %335 = vmatpush.bf16.msra.mxu0 0
      %336 = vmatpush.bf16.msra.mxu0 %v323
      %337 = vmatmul.bf16.gmra.mxu0 %v327
      %v338 = vpop.f32.mrf.mxu0
      %v339 = vadd.f32 0.0, %v338
      %v340 = vpop.f32.mrf.mxu0
      %v341 = vadd.f32 0.0, %v340
      %342 = vdwg.mxu0
      %v343 = vpack.c.bf16 %v341, %v339
      %v344 = vld [vmem:[%s3] sm:$0xf]
      %v345 = vperm.slane %v308, 0
      %vm346 = vcmask 64512
      %v348 = vsel %vm346, %v343, 0
      %vm350 = vcmask 1043456
      %v352 = vsel %vm350, %v344, 0
      %354 = vmatpush.bf16.msra.mxu0 0
      %355 = vmatpush.bf16.msra.mxu0 0
      %356 = vmatpush.bf16.msra.mxu0 0
      %357 = vmatpush.bf16.msra.mxu0 0
      %358 = vmatpush.bf16.msra.mxu0 0
      %359 = vmatpush.bf16.msra.mxu0 0
      %360 = vmatpush.bf16.msra.mxu0 0
      %361 = vmatpush.bf16.msra.mxu0 %v352
      %362 = vmatmul.bf16.gmra.mxu0 %v348
      %v363 = vpop.f32.mrf.mxu0
      %v364 = vadd.f32 %v345, %v363
      %v365 = vpop.f32.mrf.mxu0
      %v366 = vadd.f32 %v345, %v365
      %367 = vdwg.mxu0
      %v368 = vmax.f32 %v364, 0.0
      %v369 = vmax.f32 %v366, 0.0
      %v370 = vpack.c.bf16 %v369, %v368
      %v371 = vld [vmem:[%s4] sm:$0xf]
      %v372 = vld [vmem:[%s4 + $0x4] sm:$0xf]
      %v373 = vld [vmem:[%s4 + $0x8] sm:$0xf]
      %v374 = vld [vmem:[%s4 + $0xc] sm:$0xf]
      %v375 = vperm.slane %v309, 0
      %v380 = vunpack.c.l.b16 %v371
      %v381 = vunpack.c.l.b16 %v372
      %v382 = vunpack.c.l.b16 %v373
      %v383 = vunpack.c.l.b16 %v374
      %v384 = vpack.c.b16 %v381, %v380
      %v385 = vpack.c.b16 %v383, %v382
      %vm388 = vcmask 261120
      %v390 = vsel %vm388, %v370, 0
      %392 = vmatpush.bf16.msra.mxu0 0
      %393 = vmatpush.bf16.msra.mxu0 0
      %394 = vmatpush.bf16.msra.mxu0 0
      %395 = vmatpush.bf16.msra.mxu0 0
      %396 = vmatpush.bf16.msra.mxu0 0
      %397 = vmatpush.bf16.msra.mxu0 0
      %398 = vmatpush.bf16.msra.mxu0 %v385
      %399 = vmatpush.bf16.msra.mxu0 %v384
      %400 = vmatmul.bf16.gmra.mxu0 %v390
      %v401 = vpop.f32.mrf.mxu0
      %v402 = vadd.f32 %v375, %v401
      %v403 = vpop.f32.mrf.mxu0
      %v404 = vadd.f32 %v375, %v403
      %405 = vdwg.mxu0
      %v406 = vmax.f32 %v402, 0.0
      %v407 = vmax.f32 %v404, 0.0
      %v408 = vsel %vm388, %v406, 0.0
      %v409 = vsel %vm388, %v407, 0.0
      %v410 = vadd.f32 %v408, %v409
      %v411 = vrot.slane %v410, 4
      %v412 = vadd.f32 %v410, %v411
      %v413 = vrot.slane %v412, 2
      %v414 = vadd.f32 %v412, %v413
      %v415 = vrot.slane %v414, 1
      %v416 = vadd.f32 %v414, %v415
      %v417 = vmul.f32 %v416, 0.0625
      %v418 = vmul.f32 %v406, %v406
      %v419 = vmul.f32 %v407, %v407
      %v420 = vsel %vm388, %v418, 0.0
      %v421 = vsel %vm388, %v419, 0.0
      %v422 = vadd.f32 %v420, %v421
      %v423 = vrot.slane %v422, 4
      %v424 = vadd.f32 %v422, %v423
      %v425 = vrot.slane %v424, 2
      %v426 = vadd.f32 %v424, %v425
      %v427 = vrot.slane %v426, 1
      %v428 = vadd.f32 %v426, %v427
      %v429 = vmul.f32 %v428, 0.0625
      %v430 = vmul.f32 %v417, %v417
      %v431 = vsub.f32 %v429, %v430
      %v432 = vmax.f32 %v431, 0.0
      %v433 = vsub.f32 %v406, %v417
      %v434 = vsub.f32 %v407, %v417
      %v435 = vadd.f32 %v432, 1e-05
      %v436 = vrsqrt.pop %v435
      %v437 = vmul.f32 %v436, %v435
      %v438 = vmul.f32 %v437, %v436
      %v439 = vmul.f32 0.5, %v438
      %v440 = vsub.f32 1.5, %v439
      %v441 = vmul.f32 %v436, %v440
      %vm442 = vweird.f32 %v435
      %vm443 = vweird.f32 %v436
      %vm444 = vmor %vm442, %vm443
      %v445 = vsel %vm444, %v436, %v441
      %v446 = vmul.f32 %v433, %v445
      %v447 = vmul.f32 %v434, %v445
      %v448 = vpack.c.bf16 %v447, %v446
      %449 = vmatpush.bf16.msra.mxu0 0
      %450 = vmatpush.bf16.msra.mxu0 0
      %451 = vmatpush.bf16.msra.mxu0 0
      %452 = vmatpush.bf16.msra.mxu0 0
      %453 = vmatpush.bf16.msra.mxu0 0
      %454 = vmatpush.bf16.msra.mxu0 0
      %455 = vmatpush.bf16.msra.mxu0 0
      %456 = vmatpush.bf16.msra.mxu0 %v448
      %457 = vmatmul.bf16.gmra.mxu0 %v327
      %v458 = vpop.f32.mrf.mxu0
      %v459 = vadd.f32 0.0, %v458
      %v460 = vpop.f32.mrf.mxu0
      %v461 = vadd.f32 0.0, %v460
      %462 = vdwg.mxu0
      %v463 = vpack.c.bf16 %v461, %v459
      %v464 = vld [vmem:[%s5] sm:$0xf]
      %v465 = vld [vmem:[%s5 + $0x4] sm:$0xf]
      %v466 = vld [vmem:[%s5 + $0x8] sm:$0xf]
      %v467 = vld [vmem:[%s5 + $0xc] sm:$0xf]
      %v468 = vperm.slane %v310, 0
      %v473 = vunpack.c.l.b16 %v464
      %v474 = vunpack.c.l.b16 %v465
      %v475 = vunpack.c.l.b16 %v466
      %v476 = vunpack.c.l.b16 %v467
      %v477 = vpack.c.b16 %v474, %v473
      %v478 = vpack.c.b16 %v476, %v475
      %v482 = vsel %vm388, %v463, 0
      %484 = vmatpush.bf16.msra.mxu0 0
      %485 = vmatpush.bf16.msra.mxu0 0
      %486 = vmatpush.bf16.msra.mxu0 0
      %487 = vmatpush.bf16.msra.mxu0 0
      %488 = vmatpush.bf16.msra.mxu0 0
      %489 = vmatpush.bf16.msra.mxu0 0
      %490 = vmatpush.bf16.msra.mxu0 %v478
      %491 = vmatpush.bf16.msra.mxu0 %v477
      %492 = vmatmul.bf16.gmra.mxu0 %v482
      %v493 = vpop.f32.mrf.mxu0
      %v494 = vadd.f32 %v468, %v493
      %v495 = vpop.f32.mrf.mxu0
      %v496 = vadd.f32 %v468, %v495
      %497 = vdwg.mxu0
      %v498 = vmax.f32 %v494, 0.0
      %v499 = vmax.f32 %v496, 0.0
      %v500 = vpack.c.bf16 %v499, %v498
      %v501 = vld [vmem:[%s6] sm:$0xf]
      %v502 = vld [vmem:[%s6 + $0x4] sm:$0xf]
      %v503 = vld [vmem:[%s6 + $0x8] sm:$0xf]
      %v504 = vld [vmem:[%s6 + $0xc] sm:$0xf]
      %v505 = vperm.slane %v311, 0
      %v510 = vunpack.c.l.b16 %v501
      %v511 = vunpack.c.l.b16 %v502
      %v512 = vunpack.c.l.b16 %v503
      %v513 = vunpack.c.l.b16 %v504
      %v514 = vpack.c.b16 %v511, %v510
      %v515 = vpack.c.b16 %v513, %v512
      %v519 = vsel %vm388, %v500, 0
      %521 = vmatpush.bf16.msra.mxu0 0
      %522 = vmatpush.bf16.msra.mxu0 0
      %523 = vmatpush.bf16.msra.mxu0 0
      %524 = vmatpush.bf16.msra.mxu0 0
      %525 = vmatpush.bf16.msra.mxu0 0
      %526 = vmatpush.bf16.msra.mxu0 0
      %527 = vmatpush.bf16.msra.mxu0 %v515
      %528 = vmatpush.bf16.msra.mxu0 %v514
      %529 = vmatmul.bf16.gmra.mxu0 %v519
      %v530 = vpop.f32.mrf.mxu0
      %v531 = vadd.f32 %v505, %v530
      %v532 = vpop.f32.mrf.mxu0
      %v533 = vadd.f32 %v505, %v532
      %534 = vdwg.mxu0
      %v535 = vmax.f32 %v531, 0.0
      %v536 = vmax.f32 %v533, 0.0
      %v537 = vsel %vm388, %v535, 0.0
      %v538 = vsel %vm388, %v536, 0.0
      %v539 = vadd.f32 %v537, %v538
      %v540 = vrot.slane %v539, 4
      %v541 = vadd.f32 %v539, %v540
      %v542 = vrot.slane %v541, 2
      %v543 = vadd.f32 %v541, %v542
      %v544 = vrot.slane %v543, 1
      %v545 = vadd.f32 %v543, %v544
      %v546 = vmul.f32 %v545, 0.0625
      %v547 = vmul.f32 %v535, %v535
      %v548 = vmul.f32 %v536, %v536
      %v549 = vsel %vm388, %v547, 0.0
      %v550 = vsel %vm388, %v548, 0.0
      %v551 = vadd.f32 %v549, %v550
      %v552 = vrot.slane %v551, 4
      %v553 = vadd.f32 %v551, %v552
      %v554 = vrot.slane %v553, 2
      %v555 = vadd.f32 %v553, %v554
      %v556 = vrot.slane %v555, 1
      %v557 = vadd.f32 %v555, %v556
      %v558 = vmul.f32 %v557, 0.0625
      %v559 = vmul.f32 %v546, %v546
      %v560 = vsub.f32 %v558, %v559
      %v561 = vmax.f32 %v560, 0.0
      %v562 = vsub.f32 %v535, %v546
      %v563 = vsub.f32 %v536, %v546
      %v564 = vadd.f32 %v561, 1e-05
      %v565 = vrsqrt.pop %v564
      %v566 = vmul.f32 %v565, %v564
      %v567 = vmul.f32 %v566, %v565
      %v568 = vmul.f32 0.5, %v567
      %v569 = vsub.f32 1.5, %v568
      %v570 = vmul.f32 %v565, %v569
      %vm571 = vweird.f32 %v564
      %vm572 = vweird.f32 %v565
      %vm573 = vmor %vm571, %vm572
      %v574 = vsel %vm573, %v565, %v570
      %v575 = vmul.f32 %v562, %v574
      %v576 = vmul.f32 %v563, %v574
      %v578 = vsel %vm325, %v307, 0
      %580 = vmatpush.bf16.msra.mxu0 0
      %581 = vmatpush.bf16.msra.mxu0 0
      %582 = vmatpush.bf16.msra.mxu0 0
      %583 = vmatpush.bf16.msra.mxu0 0
      %584 = vmatpush.bf16.msra.mxu0 0
      %585 = vmatpush.bf16.msra.mxu0 0
      %586 = vmatpush.bf16.msra.mxu0 0
      %587 = vmatpush.bf16.msra.mxu0 %v448
      %588 = vmatmul.bf16.gmra.mxu0 %v578
      %v589 = vpop.f32.mrf.mxu0
      %v590 = vadd.f32 0.0, %v589
      %v591 = vpop.f32.mrf.mxu0
      %592 = vdwg.mxu0
      %v593 = vpack.c.bf16 %v576, %v575
      %594 = vmatpush.bf16.msra.mxu0 0
      %595 = vmatpush.bf16.msra.mxu0 0
      %596 = vmatpush.bf16.msra.mxu0 0
      %597 = vmatpush.bf16.msra.mxu0 0
      %598 = vmatpush.bf16.msra.mxu0 0
      %599 = vmatpush.bf16.msra.mxu0 0
      %600 = vmatpush.bf16.msra.mxu0 0
      %601 = vmatpush.bf16.msra.mxu0 %v593
      %602 = vmatmul.bf16.gmra.mxu0 %v578
      %v603 = vpop.f32.mrf.mxu0
      %v604 = vadd.f32 0.0, %v603
      %v605 = vpop.f32.mrf.mxu0
      %606 = vdwg.mxu0
      %608 = vrot.lane.b32.xlu0 %v604, 32
      %v609 = vpop.permute.xlu0 %608
      %v611 = vsel %vm388, %v590, %v609
      %vm612 = vcmask 523264
      %v613 = vsel %vm612, %v611, 0.0
      %614 = vst [vmem:[%s303] sm:$0x3] %v613
      %p615 = scmp.lt.s32.totalorder %s19, 2
      %s616 = scalar_select %p615, %s19, 2
      %s617 = smul.addr %s616, 2
      %s618 = scalar_lea.vmem %s8, %s617
      // Predicated region
      $region53: #{encoder_forward.3} parent=51 // pred_check
        %p619 = pneg %p210
      $region54: #{encoder_forward.3} parent=51 // pred_check_branch
        %621 = sbr.rel (%p619) target = $region56
      $region55: #{encoder_forward.3} parent=51 // pred_region
        _
      $region56: #{encoder_forward.3} parent=51 // pred_fallthru
        _
    $region52: #{encoder_forward.3} parent=5 // pred_fallthru
      _
    %p622 = scmp.le.s32.totalorder 2, %s14
    // Predicated region
    $region57: #{encoder_forward.3} parent=5 // pred_check
      %p623 = pneg %p622
    $region58: #{encoder_forward.3} parent=5 // pred_check_branch
      %625 = sbr.rel (%p623) target = $region60
    $region59: #{encoder_forward.3} parent=5 // pred_region
      %s626 = ssub.s32 %s14, 2
      // Predicated region
      $region61: #{encoder_forward.3} parent=59 // pred_check
        %p627 = pneg %p216
      $region62: #{encoder_forward.3} parent=59 // pred_check_branch
        %629 = sbr.rel (%p627) target = $region64
      $region63: #{encoder_forward.3} parent=59 // pred_region
        %p630 = scmp.lt.s32.totalorder %s20, 2
        %s631 = scalar_select %p630, %s20, 2
        %s632 = smul.addr %s631, 2
        %s633 = scalar_lea.vmem %s8, %s632
      $region64: #{encoder_forward.3} parent=59 // pred_fallthru
        _
    $region60: #{encoder_forward.3} parent=5 // pred_fallthru
      _
  $region6: #{encoder_forward.3} parent=0 // loop_footer
    %s18 = sadd.s32 1, %s14
  $region7: #{encoder_forward.3} parent=0 // loop_footer_branch
    %13 = sbr.rel target = $region3
  $region8: #{encoder_forward.3} parent=0 // loop_exit
    _

</llo_original>
